<compile_context>
chip_gen: v5e
topology: v5e:2x2
jax: 0.10.0
libtpu: 0.0.40
codegen_flags: <defaults>
</compile_context>

<pallas_src>
import functools
import math

import jax
import jax.numpy as jnp
from jax.experimental import pallas as pl
from jax.experimental.pallas import tpu as pltpu


def _fused_mlp_kernel(*refs, num_layers: int):
    """refs = (x_ref, w0, b0, w1, b1, ..., w_{L-1}, b_{L-1}, o_ref).

    All refs are whole-array VMEM blocks (unpadded; Mosaic handles layout).
    Weights are bf16, biases/activations f32.  The activation chain stays on
    chip; only the final layer's output is stored.
    """
    x_ref = refs[0]
    o_ref = refs[-1]
    wb_refs = refs[1:-1]

    h = x_ref[...]                                    # (B, D0) f32
    for i in range(num_layers):
        w = wb_refs[2 * i][...]                       # (Din, Dout) bf16
        b = wb_refs[2 * i + 1][...]                   # (1, Dout) f32 -> broadcast
        # bf16 x bf16 MXU matmul with f32 accumulation; epilogue in f32.
        h = jnp.dot(h.astype(jnp.bfloat16), w,
                    preferred_element_type=jnp.float32) + b
        if i < num_layers - 1:                        # ReLU on all but last layer
            h = jnp.maximum(h, 0.0)
    o_ref[...] = h.astype(o_ref.dtype)


def _fused_mlp(x, flat_wb, *, num_layers, out_features):
    n_inputs = 1 + 2 * num_layers
    kernel = functools.partial(_fused_mlp_kernel, num_layers=num_layers)
    return pl.pallas_call(
        kernel,
        out_shape=jax.ShapeDtypeStruct((x.shape[0], out_features), jnp.float32),
        in_specs=[pl.BlockSpec(memory_space=pltpu.MemorySpace.VMEM)] * n_inputs,
        out_specs=pl.BlockSpec(memory_space=pltpu.MemorySpace.VMEM),
    )(x, *flat_wb)


def prepare_params(params):
    """One-time (cached) conversion of params for the kernel.

    params: list of (w, b) with w:(Din, Dout) (PyTorch weight transposed),
            b:(Dout,).
    Returns list of (w_bf16:(Din,Dout), b_f32:(1,Dout)).
    This runs ONCE outside the per-call path, so the forward pays no
    padding / casting / update-slice traffic.
    """
    prepared = []
    for w, b in params:
        prepared.append((jnp.asarray(w, jnp.bfloat16),
                         jnp.asarray(b, jnp.float32).reshape(1, -1)))
    return prepared


@jax.jit
def nn_forward(prepared_params, x):
    """Forward pass of NN: ReLU on all layers except the last.

    prepared_params: output of prepare_params().  x:(B, Din) f32.
    """
    num_layers = len(prepared_params)
    out_features = prepared_params[-1][0].shape[1]
    flat_wb = []
    for w, b in prepared_params:
        flat_wb += [w, b]
    return _fused_mlp(x.astype(jnp.float32), flat_wb,
                      num_layers=num_layers, out_features=out_features)


def init_params(key, input_size, hidden_sizes, output_size):
    """Deterministic init matching PyTorch nn.Linear's U(-1/sqrt(fan_in), +1/sqrt(fan_in))."""
    sizes = [input_size] + list(hidden_sizes) + [output_size]
    params = []
    for i in range(len(sizes) - 1):
        fan_in, fan_out = sizes[i], sizes[i + 1]
        key, kw, kb = jax.random.split(key, 3)
        bound = 1.0 / math.sqrt(fan_in)
        # stored as (in, out); equals PyTorch's (out, in) transposed
        w = jax.random.uniform(kw, (fan_in, fan_out), jnp.float32, -bound, bound)
        b = jax.random.uniform(kb, (fan_out,), jnp.float32, -bound, bound)
        params.append((w, b))
    return params


if __name__ == "__main__":
    key = jax.random.PRNGKey(0)
    key, kx = jax.random.split(key)

    input_size = 32
    hidden_sizes = [64, 32]
    output_size = 16
    batch = 8

    params = init_params(key, input_size, hidden_sizes, output_size)
    prepared = prepare_params(params)          # one-time cast, outside forward
    x = jax.random.normal(kx, (batch, input_size), jnp.float32)

    out = nn_forward(prepared, x)
    out = jax.block_until_ready(out)
    assert out.shape == (batch, output_size)

    # Reference in plain JAX emulating the kernel's numerics exactly
    # (bf16 matmul inputs, f32 accumulation, f32 bias + ReLU).
    ref = x
    for i, (w, b) in enumerate(params):
        w_bf = w.astype(jnp.bfloat16).astype(jnp.float32)
        h_bf = ref.astype(jnp.bfloat16).astype(jnp.float32)
        ref = h_bf @ w_bf + b
        if i < len(params) - 1:
            ref = jnp.maximum(ref, 0.0)
    assert jnp.allclose(out, ref, atol=2e-3, rtol=2e-3), (
        f"max abs err vs bf16-consistent ref = {jnp.max(jnp.abs(out - ref))}")

    # Sanity check vs the pure-f32 reference (looser: bf16 weight rounding).
    ref32 = x
    for i, (w, b) in enumerate(params):
        ref32 = ref32 @ w + b
        if i < len(params) - 1:
            ref32 = jnp.maximum(ref32, 0.0)
    assert jnp.allclose(out, ref32, atol=5e-2, rtol=5e-2), (
        f"max abs err vs f32 ref = {jnp.max(jnp.abs(out - ref32))}")

    print("KERNEL_OK")
</pallas_src>

<mosaic_0001>
module attributes {stable_mosaic.version = 11 : i64} {
  func.func @_fused_mlp_kernel(%arg0: memref<8x32xf32, #tpu.memory_space<vmem>>, %arg1: memref<32x64xbf16, #tpu.memory_space<vmem>>, %arg2: memref<1x64xf32, #tpu.memory_space<vmem>>, %arg3: memref<64x32xbf16, #tpu.memory_space<vmem>>, %arg4: memref<1x32xf32, #tpu.memory_space<vmem>>, %arg5: memref<32x16xbf16, #tpu.memory_space<vmem>>, %arg6: memref<1x16xf32, #tpu.memory_space<vmem>>, %arg7: memref<8x16xf32, #tpu.memory_space<vmem>>) attributes {dimension_semantics = [], scalar_prefetch = 0 : i64, scratch_operands = 0 : i64, tpu.core_type = #tpu.core_type<tc>} {
    %c0 = arith.constant 0 : index
    %c0_0 = arith.constant 0 : index
    %0 = vector.load %arg0[%c0, %c0_0] : memref<8x32xf32, #tpu.memory_space<vmem>>, vector<8x32xf32>
    %c0_1 = arith.constant 0 : index
    %c0_2 = arith.constant 0 : index
    %1 = vector.load %arg1[%c0_1, %c0_2] : memref<32x64xbf16, #tpu.memory_space<vmem>>, vector<32x64xbf16>
    %c0_3 = arith.constant 0 : index
    %c0_4 = arith.constant 0 : index
    %2 = vector.load %arg2[%c0_3, %c0_4] : memref<1x64xf32, #tpu.memory_space<vmem>>, vector<1x64xf32>
    %3 = arith.truncf %0 : vector<8x32xf32> to vector<8x32xbf16>
    %cst = arith.constant dense<0.000000e+00> : vector<8x64xf32>
    %4 = tpu.matmul %3, %1, %cst {dimension_numbers = #tpu.dot_dimension_numbers<[1], [0], [0], [1], [0, 0, 1, 1], [], []>} : vector<8x32xbf16>, vector<32x64xbf16>, vector<8x64xf32> -> vector<8x64xf32>
    %5 = vector.broadcast %2 : vector<1x64xf32> to vector<8x64xf32>
    %6 = arith.addf %4, %5 : vector<8x64xf32>
    %cst_5 = arith.constant 0.000000e+00 : f32
    %7 = vector.broadcast %cst_5 : f32 to vector<8x64xf32>
    %8 = arith.maximumf %6, %7 : vector<8x64xf32>
    %c0_6 = arith.constant 0 : index
    %c0_7 = arith.constant 0 : index
    %9 = vector.load %arg3[%c0_6, %c0_7] : memref<64x32xbf16, #tpu.memory_space<vmem>>, vector<64x32xbf16>
    %c0_8 = arith.constant 0 : index
    %c0_9 = arith.constant 0 : index
    %10 = vector.load %arg4[%c0_8, %c0_9] : memref<1x32xf32, #tpu.memory_space<vmem>>, vector<1x32xf32>
    %11 = arith.truncf %8 : vector<8x64xf32> to vector<8x64xbf16>
    %cst_10 = arith.constant dense<0.000000e+00> : vector<8x32xf32>
    %12 = tpu.matmul %11, %9, %cst_10 {dimension_numbers = #tpu.dot_dimension_numbers<[1], [0], [0], [1], [0, 0, 1, 1], [], []>} : vector<8x64xbf16>, vector<64x32xbf16>, vector<8x32xf32> -> vector<8x32xf32>
    %13 = vector.broadcast %10 : vector<1x32xf32> to vector<8x32xf32>
    %14 = arith.addf %12, %13 : vector<8x32xf32>
    %cst_11 = arith.constant 0.000000e+00 : f32
    %15 = vector.broadcast %cst_11 : f32 to vector<8x32xf32>
    %16 = arith.maximumf %14, %15 : vector<8x32xf32>
    %c0_12 = arith.constant 0 : index
    %c0_13 = arith.constant 0 : index
    %17 = vector.load %arg5[%c0_12, %c0_13] : memref<32x16xbf16, #tpu.memory_space<vmem>>, vector<32x16xbf16>
    %c0_14 = arith.constant 0 : index
    %c0_15 = arith.constant 0 : index
    %18 = vector.load %arg6[%c0_14, %c0_15] : memref<1x16xf32, #tpu.memory_space<vmem>>, vector<1x16xf32>
    %19 = arith.truncf %16 : vector<8x32xf32> to vector<8x32xbf16>
    %cst_16 = arith.constant dense<0.000000e+00> : vector<8x16xf32>
    %20 = tpu.matmul %19, %17, %cst_16 {dimension_numbers = #tpu.dot_dimension_numbers<[1], [0], [0], [1], [0, 0, 1, 1], [], []>} : vector<8x32xbf16>, vector<32x16xbf16>, vector<8x16xf32> -> vector<8x16xf32>
    %21 = vector.broadcast %18 : vector<1x16xf32> to vector<8x16xf32>
    %22 = arith.addf %20, %21 : vector<8x16xf32>
    %c0_17 = arith.constant 0 : index
    %c0_18 = arith.constant 0 : index
    %23 = vector.load %arg7[%c0_17, %c0_18] : memref<8x16xf32, #tpu.memory_space<vmem>>, vector<8x16xf32>
    tpu.vector_store %arg7[%c0_17, %c0_18], %22 {strides = array<i32>} : memref<8x16xf32, #tpu.memory_space<vmem>>, vector<8x16xf32>,
    return
  }
}

</mosaic_0001>

<llo_original>
// kernel: nn_forward.1
$region0: #{nn_forward.1}
  #allocation0 [shape = 'u32[]', space=smem, size = 0x4, offset = 0x4, fixed_abs, tag = 'smem constant byte address 0x4 - core index']
  #allocation1 [shape = 'u32[72,128]{1,0:T(1,128)}', space=vmem, size = 0x9000, scoped, tag = 'internal scratch']
  %s0 = inlined_call_operand.vmem [shape: f32[8,32], index: 0, kind: input, shape index: {}]
  %s1 = inlined_call_operand.vmem [shape: bf16[32,64], index: 1, kind: input, shape index: {}]
  %s2 = inlined_call_operand.vmem [shape: f32[1,64], index: 2, kind: input, shape index: {}]
  %s3 = inlined_call_operand.vmem [shape: bf16[64,32], index: 3, kind: input, shape index: {}]
  %s4 = inlined_call_operand.vmem [shape: f32[1,32], index: 4, kind: input, shape index: {}]
  %s5 = inlined_call_operand.vmem [shape: bf16[32,16], index: 5, kind: input, shape index: {}]
  %s6 = inlined_call_operand.vmem [shape: f32[1,16], index: 6, kind: input, shape index: {}]
  %s7 = inlined_call_operand.hbm [shape: f32[8,16], index: 7, kind: output, shape index: {}]
  %s8 = sld [smem:[#allocation0]]
  $region38: #{nn_forward.1} parent=0
    _
  %s10 = ssub.s32 1, %s8
  %s11 = scalar_select 0, %s10, %s8
  $region1: #{nn_forward.1} parent=0
    #allocation2 [shape = 'u8[4096]{0}', space=vmem, size = 0x1000, scoped, tag = 'output window, operand 0, single buffered']
    #allocation3 [shape = 's32[1]{0}', space=sflag, size = 0x4, scoped, tag = 'scoped memory for nn_forward.1']
    %12 = vsyncpa [#allocation3], 0
    // Predicated region
    $region2: #{nn_forward.1} parent=1 // pred_check
      _
    $region3: #{nn_forward.1} parent=1 // pred_check_branch
      %14 = sbr.rel (0) target = $region5
    $region4: #{nn_forward.1} parent=1 // pred_region
      _
    $region5: #{nn_forward.1} parent=1 // pred_fallthru
      _
    // Predicated region
    $region6: #{nn_forward.1} parent=1 // pred_check
      _
    $region7: #{nn_forward.1} parent=1 // pred_check_branch
      %16 = sbr.rel (0) target = $region9
    $region8: #{nn_forward.1} parent=1 // pred_region
      _
    $region9: #{nn_forward.1} parent=1 // pred_fallthru
      _
    // Predicated region
    $region10: #{nn_forward.1} parent=1 // pred_check
      _
    $region11: #{nn_forward.1} parent=1 // pred_check_branch
      %18 = sbr.rel (0) target = $region13
    $region12: #{nn_forward.1} parent=1 // pred_region
      _
    $region13: #{nn_forward.1} parent=1 // pred_fallthru
      _
    // Predicated region
    $region14: #{nn_forward.1} parent=1 // pred_check
      _
    $region15: #{nn_forward.1} parent=1 // pred_check_branch
      %20 = sbr.rel (0) target = $region17
    $region16: #{nn_forward.1} parent=1 // pred_region
      _
    $region17: #{nn_forward.1} parent=1 // pred_fallthru
      _
    // Predicated region
    $region18: #{nn_forward.1} parent=1 // pred_check
      _
    $region19: #{nn_forward.1} parent=1 // pred_check_branch
      %22 = sbr.rel (0) target = $region21
    $region20: #{nn_forward.1} parent=1 // pred_region
      _
    $region21: #{nn_forward.1} parent=1 // pred_fallthru
      _
    // Predicated region
    $region22: #{nn_forward.1} parent=1 // pred_check
      _
    $region23: #{nn_forward.1} parent=1 // pred_check_branch
      %24 = sbr.rel (0) target = $region25
    $region24: #{nn_forward.1} parent=1 // pred_region
      _
    $region25: #{nn_forward.1} parent=1 // pred_fallthru
      _
    // Predicated region
    $region26: #{nn_forward.1} parent=1 // pred_check
      _
    $region27: #{nn_forward.1} parent=1 // pred_check_branch
      %26 = sbr.rel (0) target = $region29
    $region28: #{nn_forward.1} parent=1 // pred_region
      _
    $region29: #{nn_forward.1} parent=1 // pred_fallthru
      _
    %v28 = vld [vmem:[%s0] sm:$0xff]
    %v29 = vld [vmem:[%s1] sm:$0xf]
    %v30 = vld [vmem:[%s1 + $0x4] sm:$0xf]
    %v31 = vld [vmem:[%s1 + $0x8] sm:$0xf]
    %v32 = vld [vmem:[%s1 + $0xc] sm:$0xf]
    %v33 = vld [vmem:[%s2] sm:$0x1]
    %v34 = vpack.c.bf16 %v28, %v28
    %v36 = vperm.slane %v33, 0
    %v42 = vunpack.c.l.b16 %v29
    %v43 = vunpack.c.l.b16 %v30
    %v44 = vunpack.c.l.b16 %v31
    %v45 = vunpack.c.l.b16 %v32
    %v46 = vpack.c.b16 %v43, %v42
    %v47 = vpack.c.b16 %v45, %v44
    %vm50 = vcmask 261120
    %v52 = vsel %vm50, %v34, 0
    %54 = vmatpush.bf16.msra.mxu0 0
    %55 = vmatpush.bf16.msra.mxu0 0
    %56 = vmatpush.bf16.msra.mxu0 0
    %57 = vmatpush.bf16.msra.mxu0 0
    %58 = vmatpush.bf16.msra.mxu0 0
    %59 = vmatpush.bf16.msra.mxu0 0
    %60 = vmatpush.bf16.msra.mxu0 %v47
    %61 = vmatpush.bf16.msra.mxu0 %v46
    %62 = vmatmul.bf16.gmra.mxu0 %v52
    %v63 = vpop.f32.mrf.mxu0
    %v64 = vadd.f32 %v36, %v63
    %v65 = vpop.f32.mrf.mxu0
    %66 = vdwg.mxu0
    %v67 = vmax.f32 %v64, 0.0
    %v68 = vld [vmem:[%s3] sm:$0xf]
    %v69 = vld [vmem:[%s3 + $0x4] sm:$0xf]
    %v70 = vld [vmem:[%s3 + $0x8] sm:$0xf]
    %v71 = vld [vmem:[%s3 + $0xc] sm:$0xf]
    %v72 = vld [vmem:[%s3 + $0x10] sm:$0xf]
    %v73 = vld [vmem:[%s3 + $0x14] sm:$0xf]
    %v74 = vld [vmem:[%s3 + $0x18] sm:$0xf]
    %v75 = vld [vmem:[%s3 + $0x1c] sm:$0xf]
    %v76 = vld [vmem:[%s4] sm:$0x1]
    %v77 = vpack.c.bf16 %v67, %v67
    %v79 = vperm.slane %v76, 0
    %v89 = vunpack.c.l.b16 %v68
    %v90 = vunpack.c.l.b16 %v69
    %v91 = vunpack.c.l.b16 %v70
    %v92 = vunpack.c.l.b16 %v71
    %v93 = vunpack.c.l.b16 %v72
    %v94 = vunpack.c.l.b16 %v73
    %v95 = vunpack.c.l.b16 %v74
    %v96 = vunpack.c.l.b16 %v75
    %v97 = vpack.c.b16 %v90, %v89
    %v98 = vpack.c.b16 %v92, %v91
    %v99 = vpack.c.b16 %v94, %v93
    %v100 = vpack.c.b16 %v96, %v95
    %vm105 = vcmask 523264
    %v107 = vsel %vm105, %v77, 0
    %109 = vmatpush.bf16.msra.mxu0 0
    %110 = vmatpush.bf16.msra.mxu0 0
    %111 = vmatpush.bf16.msra.mxu0 0
    %112 = vmatpush.bf16.msra.mxu0 0
    %113 = vmatpush.bf16.msra.mxu0 %v100
    %114 = vmatpush.bf16.msra.mxu0 %v99
    %115 = vmatpush.bf16.msra.mxu0 %v98
    %116 = vmatpush.bf16.msra.mxu0 %v97
    %117 = vmatmul.bf16.gmra.mxu0 %v107
    %v118 = vpop.f32.mrf.mxu0
    %v119 = vadd.f32 %v79, %v118
    %v120 = vpop.f32.mrf.mxu0
    %121 = vdwg.mxu0
    %v122 = vmax.f32 %v119, 0.0
    %v123 = vld [vmem:[%s5] sm:$0xf]
    %v124 = vld [vmem:[%s5 + $0x4] sm:$0xf]
    %v125 = vld [vmem:[%s5 + $0x8] sm:$0xf]
    %v126 = vld [vmem:[%s5 + $0xc] sm:$0xf]
    %v127 = vld [vmem:[%s6] sm:$0x1]
    %v128 = vpack.c.bf16 %v122, %v122
    %v130 = vperm.slane %v127, 0
    %v136 = vunpack.c.l.b16 %v123
    %v137 = vunpack.c.l.b16 %v124
    %v138 = vunpack.c.l.b16 %v125
    %v139 = vunpack.c.l.b16 %v126
    %v140 = vpack.c.b16 %v137, %v136
    %v141 = vpack.c.b16 %v139, %v138
    %v145 = vsel %vm50, %v128, 0
    %147 = vmatpush.bf16.msra.mxu0 0
    %148 = vmatpush.bf16.msra.mxu0 0
    %149 = vmatpush.bf16.msra.mxu0 0
    %150 = vmatpush.bf16.msra.mxu0 0
    %151 = vmatpush.bf16.msra.mxu0 0
    %152 = vmatpush.bf16.msra.mxu0 0
    %153 = vmatpush.bf16.msra.mxu0 %v141
    %154 = vmatpush.bf16.msra.mxu0 %v140
    %155 = vmatmul.bf16.gmra.mxu0 %v145
    %v156 = vpop.f32.mrf.mxu0
    %v157 = vadd.f32 %v130, %v156
    %v158 = vpop.f32.mrf.mxu0
    %159 = vdwg.mxu0
    %vm160 = vcmask 130048
    %161 = vst.msk [vmem:[#allocation2] sm:$0xff] %vm160, %v157
    // Predicated region
    $region30: #{nn_forward.1} parent=1 // pred_check
      _
    $region31: #{nn_forward.1} parent=1 // pred_check_branch
      %163 = sbr.rel (0) target = $region33
    $region32: #{nn_forward.1} parent=1 // pred_region
      %165 = vsyncadd [#allocation3], 0
      %s167 = sshll.u32 [#allocation2], 4
      %s168 = int_to_ptr.vmem [resolvable:$true] %s167
      %s169 = sshll.u32 %s7, 4
      %s170 = int_to_ptr.hbm [resolvable:$true] %s169
      %172 = dma.vmem_to_hbm [thread:$0]  %s168, 128, %s170, [#allocation3]
    $region33: #{nn_forward.1} parent=1 // pred_fallthru
      _
    // Predicated region
    $region34: #{nn_forward.1} parent=1 // pred_check
      _
    $region35: #{nn_forward.1} parent=1 // pred_check_branch
      %174 = sbr.rel (0) target = $region37
    $region36: #{nn_forward.1} parent=1 // pred_region
      %176 = dma.done [#allocation3], 128
    $region37: #{nn_forward.1} parent=1 // pred_fallthru
      _
    %177 = vsyncpa [#allocation3], 1

</llo_original>
